<compile_context>
chip_gen: v7x
topology: tpu7x:2x2x1
jax: 0.10.0
libtpu: 0.0.40
codegen_flags: <defaults>
</compile_context>

<pallas_src>
import jax
import jax.numpy as jnp
from jax.experimental import pallas as pl
from jax.experimental.pallas import tpu as pltpu


def _outconv_kernel(x_ref, w_ref, b_ref, o_ref):
    # x_ref: (N, C_in, tm) VMEM    w_ref: (C_out, C_in) SMEM
    # b_ref: (C_out,)      SMEM    o_ref: (N, C_out, tm) VMEM
    c_in = x_ref.shape[1]
    c_out = o_ref.shape[1]
    x = x_ref[...].astype(jnp.float32)          # (N, C_in, tm); no-op for f32 inputs
    outs = []
    for o in range(c_out):                      # tiny static loops, unrolled at trace time
        acc = x[:, 0, :] * w_ref[o, 0]
        for c in range(1, c_in):
            acc = acc + x[:, c, :] * w_ref[o, c]
        acc = acc + b_ref[o]
        outs.append(acc[:, None, :])
    # Single lane-dense store of the whole (N, C_out, tm) tile.
    o_ref[...] = jnp.concatenate(outs, axis=1).astype(o_ref.dtype)


def _pick_spatial_tile(hw_pad, tm_target):
    """Largest multiple of 128 dividing hw_pad, <= tm_target, keeping the grid
    at >= 2 steps when possible (feeds both v7x TensorCores)."""
    base = hw_pad // 128
    max_d = max(1, tm_target // 128)
    if base >= 2:
        max_d = min(max_d, base // 2)           # keep >= 2 grid steps
    d = 1
    for cand in range(1, max_d + 1):
        if base % cand == 0:
            d = cand
    return d * 128


def outconv_forward(x_nchw, weight, bias, *, tm=65536):
    """1x1 conv forward (same semantics as nn.Conv2d(in_ch, out_ch, 1)).

    x_nchw : (N, C_in, H, W)
    weight : (C_out, C_in, 1, 1)
    bias   : (C_out,)
    returns: (N, C_out, H, W) in x_nchw.dtype
    """
    N, C_in, H, W = x_nchw.shape
    C_out = weight.shape[0]
    hw = H * W
    out_dtype = x_nchw.dtype
    itemsize = jnp.dtype(out_dtype).itemsize

    # VMEM-aware cap on the lane tile: keep one input + one output block under
    # ~8 MB each (x2 for double buffering stays well inside the scoped limit).
    bytes_per_lane = N * (C_in + C_out) * itemsize
    vmem_budget = 8 * 1024 * 1024
    tm_cap = max(128, (vmem_budget // bytes_per_lane) // 128 * 128)

    hw_pad = ((hw + 127) // 128) * 128          # lane multiple; usually == hw
    tm = _pick_spatial_tile(hw_pad, min(tm, tm_cap))
    grid = (hw_pad // tm,)

    x3 = x_nchw.reshape(N, C_in, hw)            # pure reshape, no transpose
    if hw_pad != hw:
        # Ragged spatial extents only: one pad pass; padded lanes produce
        # `bias` and are sliced off below.
        x3 = jnp.pad(x3, ((0, 0), (0, 0), (0, hw_pad - hw)))

    w2 = weight.reshape(C_out, C_in)            # scalars, live in SMEM
    b1 = bias.reshape(C_out)

    cost = pl.CostEstimate(
        flops=2 * N * hw_pad * C_in * C_out,
        transcendentals=0,
        bytes_accessed=(x3.size * x3.dtype.itemsize
                        + w2.size * w2.dtype.itemsize
                        + b1.size * b1.dtype.itemsize
                        + N * C_out * hw_pad * itemsize),
    )

    out3 = pl.pallas_call(
        _outconv_kernel,
        out_shape=jax.ShapeDtypeStruct((N, C_out, hw_pad), out_dtype),
        grid_spec=pltpu.PrefetchScalarGridSpec(
            num_scalar_prefetch=0,
            grid=grid,
            in_specs=[
                # Full batch + all channels per block; spatial on lanes.
                pl.BlockSpec((N, C_in, tm), lambda j: (0, 0, j)),
                # Tiny weight / bias as scalars in SMEM (no VMEM tile, no DMA stream).
                pl.BlockSpec(memory_space=pltpu.MemorySpace.SMEM),
                pl.BlockSpec(memory_space=pltpu.MemorySpace.SMEM),
            ],
            out_specs=pl.BlockSpec((N, C_out, tm), lambda j: (0, 0, j)),
        ),
        compiler_params=pltpu.CompilerParams(
            dimension_semantics=("parallel",)),
        cost_estimate=cost,
    )(x3, w2, b1)

    if hw_pad != hw:
        out3 = out3[:, :, :hw]
    return out3.reshape(N, C_out, H, W)         # already NCHW


if __name__ == "__main__":
    # Module config: in_ch=4, out_ch=3; input NCHW = (2, 4, 16, 16)
    N, C_in, C_out, H, W = 2, 4, 3, 16, 16

    key = jax.random.PRNGKey(0)
    kx, kw, kb = jax.random.split(key, 3)

    x = jax.random.normal(kx, (N, C_in, H, W), dtype=jnp.float32)
    weight = jax.random.normal(kw, (C_out, C_in, 1, 1), dtype=jnp.float32) * 0.1
    bias = jax.random.normal(kb, (C_out,), dtype=jnp.float32) * 0.1

    out = outconv_forward(x, weight, bias)
    out = jax.block_until_ready(out)

    # Pure f32 reference (kernel is f32 end-to-end — matches nn.Conv2d math).
    ref = jnp.einsum("nchw,oc->nohw", x, weight.reshape(C_out, C_in),
                     precision=jax.lax.Precision.HIGHEST) + bias[None, :, None, None]

    assert out.shape == (N, C_out, H, W)
    err = float(jnp.max(jnp.abs(out - ref)))
    assert jnp.allclose(out, ref, atol=1e-4, rtol=1e-4), err

    print("KERNEL_OK")
</pallas_src>

<mosaic_0001>
module attributes {stable_mosaic.version = 11 : i64} {
  func.func @_outconv_kernel(%arg0: i32, %arg1: memref<2x4x128xf32, #tpu.memory_space<vmem>>, %arg2: memref<3x4xf32, #tpu.memory_space<smem>>, %arg3: memref<3xf32, #tpu.memory_space<smem>>, %arg4: memref<2x3x128xf32, #tpu.memory_space<vmem>>) attributes {dimension_semantics = [#tpu.dimension_semantics<parallel>], iteration_bounds = array<i64: 2>, scalar_prefetch = 0 : i64, scratch_operands = 0 : i64, tpu.core_type = #tpu.core_type<tc>, window_params = [{transform_indices = @transform_0, window_bounds = array<i64: 2, 4, 128>}, {transform_indices = @transform_1, window_bounds = array<i64: 3, 4>}, {transform_indices = @transform_2, window_bounds = array<i64: 3>}, {transform_indices = @transform_3, window_bounds = array<i64: 2, 3, 128>}]} {
    %c0 = arith.constant 0 : index
    %c0_0 = arith.constant 0 : index
    %c0_1 = arith.constant 0 : index
    %0 = vector.load %arg1[%c0, %c0_0, %c0_1] : memref<2x4x128xf32, #tpu.memory_space<vmem>>, vector<2x4x128xf32>
    %1 = vector.extract_strided_slice %0 {offsets = [0, 0, 0], sizes = [2, 1, 128], strides = [1, 1, 1]} : vector<2x4x128xf32> to vector<2x1x128xf32>
    %2 = vector.shape_cast %1 : vector<2x1x128xf32> to vector<2x128xf32>
    %c0_2 = arith.constant 0 : index
    %c0_3 = arith.constant 0 : index
    %3 = memref.load %arg2[%c0_2, %c0_3] : memref<3x4xf32, #tpu.memory_space<smem>>
    %4 = vector.broadcast %3 : f32 to vector<2x128xf32>
    %5 = arith.mulf %2, %4 : vector<2x128xf32>
    %6 = vector.extract_strided_slice %0 {offsets = [0, 1, 0], sizes = [2, 1, 128], strides = [1, 1, 1]} : vector<2x4x128xf32> to vector<2x1x128xf32>
    %7 = vector.shape_cast %6 : vector<2x1x128xf32> to vector<2x128xf32>
    %c0_4 = arith.constant 0 : index
    %c1 = arith.constant 1 : index
    %8 = memref.load %arg2[%c0_4, %c1] : memref<3x4xf32, #tpu.memory_space<smem>>
    %9 = vector.broadcast %8 : f32 to vector<2x128xf32>
    %10 = arith.mulf %7, %9 : vector<2x128xf32>
    %11 = arith.addf %5, %10 : vector<2x128xf32>
    %12 = vector.extract_strided_slice %0 {offsets = [0, 2, 0], sizes = [2, 1, 128], strides = [1, 1, 1]} : vector<2x4x128xf32> to vector<2x1x128xf32>
    %13 = vector.shape_cast %12 : vector<2x1x128xf32> to vector<2x128xf32>
    %c0_5 = arith.constant 0 : index
    %c2 = arith.constant 2 : index
    %14 = memref.load %arg2[%c0_5, %c2] : memref<3x4xf32, #tpu.memory_space<smem>>
    %15 = vector.broadcast %14 : f32 to vector<2x128xf32>
    %16 = arith.mulf %13, %15 : vector<2x128xf32>
    %17 = arith.addf %11, %16 : vector<2x128xf32>
    %18 = vector.extract_strided_slice %0 {offsets = [0, 3, 0], sizes = [2, 1, 128], strides = [1, 1, 1]} : vector<2x4x128xf32> to vector<2x1x128xf32>
    %19 = vector.shape_cast %18 : vector<2x1x128xf32> to vector<2x128xf32>
    %c0_6 = arith.constant 0 : index
    %c3 = arith.constant 3 : index
    %20 = memref.load %arg2[%c0_6, %c3] : memref<3x4xf32, #tpu.memory_space<smem>>
    %21 = vector.broadcast %20 : f32 to vector<2x128xf32>
    %22 = arith.mulf %19, %21 : vector<2x128xf32>
    %23 = arith.addf %17, %22 : vector<2x128xf32>
    %c0_7 = arith.constant 0 : index
    %24 = memref.load %arg3[%c0_7] : memref<3xf32, #tpu.memory_space<smem>>
    %25 = vector.broadcast %24 : f32 to vector<2x128xf32>
    %26 = arith.addf %23, %25 : vector<2x128xf32>
    %27 = vector.shape_cast %26 : vector<2x128xf32> to vector<2x1x128xf32>
    %28 = vector.extract_strided_slice %0 {offsets = [0, 0, 0], sizes = [2, 1, 128], strides = [1, 1, 1]} : vector<2x4x128xf32> to vector<2x1x128xf32>
    %29 = vector.shape_cast %28 : vector<2x1x128xf32> to vector<2x128xf32>
    %c1_8 = arith.constant 1 : index
    %c0_9 = arith.constant 0 : index
    %30 = memref.load %arg2[%c1_8, %c0_9] : memref<3x4xf32, #tpu.memory_space<smem>>
    %31 = vector.broadcast %30 : f32 to vector<2x128xf32>
    %32 = arith.mulf %29, %31 : vector<2x128xf32>
    %33 = vector.extract_strided_slice %0 {offsets = [0, 1, 0], sizes = [2, 1, 128], strides = [1, 1, 1]} : vector<2x4x128xf32> to vector<2x1x128xf32>
    %34 = vector.shape_cast %33 : vector<2x1x128xf32> to vector<2x128xf32>
    %c1_10 = arith.constant 1 : index
    %c1_11 = arith.constant 1 : index
    %35 = memref.load %arg2[%c1_10, %c1_11] : memref<3x4xf32, #tpu.memory_space<smem>>
    %36 = vector.broadcast %35 : f32 to vector<2x128xf32>
    %37 = arith.mulf %34, %36 : vector<2x128xf32>
    %38 = arith.addf %32, %37 : vector<2x128xf32>
    %39 = vector.extract_strided_slice %0 {offsets = [0, 2, 0], sizes = [2, 1, 128], strides = [1, 1, 1]} : vector<2x4x128xf32> to vector<2x1x128xf32>
    %40 = vector.shape_cast %39 : vector<2x1x128xf32> to vector<2x128xf32>
    %c1_12 = arith.constant 1 : index
    %c2_13 = arith.constant 2 : index
    %41 = memref.load %arg2[%c1_12, %c2_13] : memref<3x4xf32, #tpu.memory_space<smem>>
    %42 = vector.broadcast %41 : f32 to vector<2x128xf32>
    %43 = arith.mulf %40, %42 : vector<2x128xf32>
    %44 = arith.addf %38, %43 : vector<2x128xf32>
    %45 = vector.extract_strided_slice %0 {offsets = [0, 3, 0], sizes = [2, 1, 128], strides = [1, 1, 1]} : vector<2x4x128xf32> to vector<2x1x128xf32>
    %46 = vector.shape_cast %45 : vector<2x1x128xf32> to vector<2x128xf32>
    %c1_14 = arith.constant 1 : index
    %c3_15 = arith.constant 3 : index
    %47 = memref.load %arg2[%c1_14, %c3_15] : memref<3x4xf32, #tpu.memory_space<smem>>
    %48 = vector.broadcast %47 : f32 to vector<2x128xf32>
    %49 = arith.mulf %46, %48 : vector<2x128xf32>
    %50 = arith.addf %44, %49 : vector<2x128xf32>
    %c1_16 = arith.constant 1 : index
    %51 = memref.load %arg3[%c1_16] : memref<3xf32, #tpu.memory_space<smem>>
    %52 = vector.broadcast %51 : f32 to vector<2x128xf32>
    %53 = arith.addf %50, %52 : vector<2x128xf32>
    %54 = vector.shape_cast %53 : vector<2x128xf32> to vector<2x1x128xf32>
    %55 = vector.extract_strided_slice %0 {offsets = [0, 0, 0], sizes = [2, 1, 128], strides = [1, 1, 1]} : vector<2x4x128xf32> to vector<2x1x128xf32>
    %56 = vector.shape_cast %55 : vector<2x1x128xf32> to vector<2x128xf32>
    %c2_17 = arith.constant 2 : index
    %c0_18 = arith.constant 0 : index
    %57 = memref.load %arg2[%c2_17, %c0_18] : memref<3x4xf32, #tpu.memory_space<smem>>
    %58 = vector.broadcast %57 : f32 to vector<2x128xf32>
    %59 = arith.mulf %56, %58 : vector<2x128xf32>
    %60 = vector.extract_strided_slice %0 {offsets = [0, 1, 0], sizes = [2, 1, 128], strides = [1, 1, 1]} : vector<2x4x128xf32> to vector<2x1x128xf32>
    %61 = vector.shape_cast %60 : vector<2x1x128xf32> to vector<2x128xf32>
    %c2_19 = arith.constant 2 : index
    %c1_20 = arith.constant 1 : index
    %62 = memref.load %arg2[%c2_19, %c1_20] : memref<3x4xf32, #tpu.memory_space<smem>>
    %63 = vector.broadcast %62 : f32 to vector<2x128xf32>
    %64 = arith.mulf %61, %63 : vector<2x128xf32>
    %65 = arith.addf %59, %64 : vector<2x128xf32>
    %66 = vector.extract_strided_slice %0 {offsets = [0, 2, 0], sizes = [2, 1, 128], strides = [1, 1, 1]} : vector<2x4x128xf32> to vector<2x1x128xf32>
    %67 = vector.shape_cast %66 : vector<2x1x128xf32> to vector<2x128xf32>
    %c2_21 = arith.constant 2 : index
    %c2_22 = arith.constant 2 : index
    %68 = memref.load %arg2[%c2_21, %c2_22] : memref<3x4xf32, #tpu.memory_space<smem>>
    %69 = vector.broadcast %68 : f32 to vector<2x128xf32>
    %70 = arith.mulf %67, %69 : vector<2x128xf32>
    %71 = arith.addf %65, %70 : vector<2x128xf32>
    %72 = vector.extract_strided_slice %0 {offsets = [0, 3, 0], sizes = [2, 1, 128], strides = [1, 1, 1]} : vector<2x4x128xf32> to vector<2x1x128xf32>
    %73 = vector.shape_cast %72 : vector<2x1x128xf32> to vector<2x128xf32>
    %c2_23 = arith.constant 2 : index
    %c3_24 = arith.constant 3 : index
    %74 = memref.load %arg2[%c2_23, %c3_24] : memref<3x4xf32, #tpu.memory_space<smem>>
    %75 = vector.broadcast %74 : f32 to vector<2x128xf32>
    %76 = arith.mulf %73, %75 : vector<2x128xf32>
    %77 = arith.addf %71, %76 : vector<2x128xf32>
    %c2_25 = arith.constant 2 : index
    %78 = memref.load %arg3[%c2_25] : memref<3xf32, #tpu.memory_space<smem>>
    %79 = vector.broadcast %78 : f32 to vector<2x128xf32>
    %80 = arith.addf %77, %79 : vector<2x128xf32>
    %81 = vector.shape_cast %80 : vector<2x128xf32> to vector<2x1x128xf32>
    %82 = tpu.concatenate %27, %54, %81 in 1 : vector<2x1x128xf32>, vector<2x1x128xf32>, vector<2x1x128xf32> -> vector<2x3x128xf32>
    %c0_26 = arith.constant 0 : index
    %c0_27 = arith.constant 0 : index
    %c0_28 = arith.constant 0 : index
    %83 = vector.load %arg4[%c0_26, %c0_27, %c0_28] : memref<2x3x128xf32, #tpu.memory_space<vmem>>, vector<2x3x128xf32>
    tpu.vector_store %arg4[%c0_26, %c0_27, %c0_28], %82 {strides = array<i32>} : memref<2x3x128xf32, #tpu.memory_space<vmem>>, vector<2x3x128xf32>,
    return
  }
  func.func @transform_0(%arg0: i32) -> (i32, i32, i32) {
    %c0_i32 = arith.constant 0 : i32
    %c0_i32_0 = arith.constant 0 : i32
    %c0_i32_1 = arith.constant 0 : i32
    return %c0_i32, %c0_i32_0, %arg0 : i32, i32, i32
  }
  func.func @transform_1(%arg0: i32) -> (i32, i32) {
    %c0_i32 = arith.constant 0 : i32
    %c0_i32_0 = arith.constant 0 : i32
    %c0_i32_1 = arith.constant 0 : i32
    return %c0_i32, %c0_i32_0 : i32, i32
  }
  func.func @transform_2(%arg0: i32) -> i32 {
    %c0_i32 = arith.constant 0 : i32
    %c0_i32_0 = arith.constant 0 : i32
    return %c0_i32 : i32
  }
  func.func @transform_3(%arg0: i32) -> (i32, i32, i32) {
    %c0_i32 = arith.constant 0 : i32
    %c0_i32_0 = arith.constant 0 : i32
    %c0_i32_1 = arith.constant 0 : i32
    return %c0_i32, %c0_i32_0, %arg0 : i32, i32, i32
  }
}

</mosaic_0001>

<llo_original>
// kernel: tpu_custom_call.1
$region0: #{tpu_custom_call.1}
  #allocation0 [shape = 'u32[]', space=smem, size = 0x4, offset = 0x4, fixed_abs, tag = 'smem constant byte address 0x4 - core index']
  #allocation1 [shape = 'u32[144,128]{1,0:T(1,128)}', space=vmem, size = 0x12000, scoped, tag = 'internal scratch']
  %s0 = inlined_call_operand.hbm [shape: f32[2,4,256], index: 0, kind: input, shape index: {}]
  %s1 = inlined_call_operand.hbm [shape: f32[3,4], index: 1, kind: input, shape index: {}]
  %s2 = inlined_call_operand.vmem [shape: f32[3], index: 2, kind: input, shape index: {}]
  %s3 = inlined_call_operand.vmem [shape: f32[2,3,256], index: 3, kind: output, shape index: {}]
  %s4 = sld [smem:[#allocation0]]
  $region94: #{tpu_custom_call.1} parent=0
    _
  %s6 = ssub.s32 1, %s4
  %s7 = scalar_select 0, %s6, %s4
  $region1: #{tpu_custom_call.1} parent=0
    #allocation2 [shape = 'u8[8192]{0}', space=vmem, size = 0x2000, scoped, tag = 'input window, operand 0']
    #allocation3 [shape = 's32[2]{0}', space=sflag, size = 0x8, scoped, tag = 'scoped memory for tpu_custom_call.1']
    #allocation4 [shape = 's32[2]{0}', space=sflag, size = 0x8, scoped, tag = 'scoped memory for tpu_custom_call.1']
    #allocation5 [shape = 's32[2]{0}', space=sflag, size = 0x8, scoped, tag = 'scoped memory for tpu_custom_call.1']
    #allocation6 [shape = 'u8[2048]{0}', space=smem, size = 0x800, scoped, tag = 'input window, operand 1, single buffered']
    #allocation7 [shape = 'u8[512]{0}', space=smem, size = 0x200, scoped, tag = 'input window, operand 2, single buffered']
    #allocation8 [shape = 'u8[8192]{0}', space=vmem, size = 0x2000, scoped, tag = 'output window, operand 0']
    %8 = vsyncpa [#allocation3], 0
    %s9 = scalar_lea.sflag [#allocation3], 1
    %10 = vsyncpa %s9, 0
    %11 = vsyncpa [#allocation4], 0
    %12 = vsyncpa [#allocation5], 0
    loop: start=0, step=1, limit=4
    $region2: #{tpu_custom_call.1} parent=1 // loop_pre_header
      _
    $region3: #{tpu_custom_call.1} parent=1 // loop_header
      %s14 = sphi 0, %s18
      %p15 = scmp.ge.s32.totalorder %s14, 4
      %s24 = sphi 0, %s26
      %s27 = sphi 0, %s24
      %s28 = sphi 0, %s27
      %s44 = sphi 0, %s28
      %s48 = sphi 0, %s48
      %s50 = sphi 0, %s48
      %s51 = sphi 0, %s50
      %s65 = sphi 0, %s51
      %s69 = sphi 0, %s69
      %s71 = sphi 0, %s69
      %s72 = sphi 0, %s71
      %s86 = sphi 0, %s72
      %s92 = sphi 0, %s94
      %s95 = sphi 0, %s92
      %s96 = sphi 0, %s95
      %s112 = sphi 0, %s96
    $region4: #{tpu_custom_call.1} parent=1 // loop_header_branch
      %17 = sbr.rel (%p15) target = $region8
    $region5: #{tpu_custom_call.1} parent=1 // loop_body
      %s19 = ssub.s32 %s14, 1
      %s20 = ssub.s32 %s14, 2
      %s21 = sadd.s32 %s14, 1
      %s22 = ssub.s32 %s14, %s21
      %p23 = scmp.eq.s32.totalorder %s22, 0
      %s25 = sadd.s32 %s24, 1
      %s26 = scalar_select %p23, %s24, %s25
      %p29 = pneg %p23
      %p30 = scmp.eq.s32.totalorder %s14, 1
      %p31 = por %p29, %p30
      %p32 = scmp.ne.s32.totalorder %s24, %s27
      %p33 = scmp.eq.s32.totalorder %s14, 0
      %p34 = por %p32, %p33
      %p35 = scmp.ne.s32.totalorder %s24, %s27
      %p36 = scmp.eq.s32.totalorder %s19, 1
      %p37 = por %p35, %p36
      %p38 = scmp.ne.s32.totalorder %s27, %s28
      %p39 = scmp.eq.s32.totalorder %s19, 0
      %p40 = por %p38, %p39
      %p41 = scmp.ne.s32.totalorder %s27, %s28
      %p42 = scmp.eq.s32.totalorder %s20, 1
      %p43 = por %p41, %p42
      %p45 = scmp.ne.s32.totalorder %s28, %s44
      %p46 = scmp.eq.s32.totalorder %s20, 0
      %p47 = por %p45, %p46
      %s49 = sadd.s32 %s48, 1
      %p52 = scmp.eq.s32.totalorder %s14, 1
      %p53 = scmp.ne.s32.totalorder %s48, %s50
      %p54 = scmp.eq.s32.totalorder %s14, 0
      %p55 = por %p53, %p54
      %p56 = scmp.ne.s32.totalorder %s48, %s50
      %p57 = scmp.eq.s32.totalorder %s19, 1
      %p58 = por %p56, %p57
      %p59 = scmp.ne.s32.totalorder %s50, %s51
      %p60 = scmp.eq.s32.totalorder %s19, 0
      %p61 = por %p59, %p60
      %p62 = scmp.ne.s32.totalorder %s50, %s51
      %p63 = scmp.eq.s32.totalorder %s20, 1
      %p64 = por %p62, %p63
      %p66 = scmp.ne.s32.totalorder %s51, %s65
      %p67 = scmp.eq.s32.totalorder %s20, 0
      %p68 = por %p66, %p67
      %s70 = sadd.s32 %s69, 1
      %p73 = scmp.eq.s32.totalorder %s14, 1
      %p74 = scmp.ne.s32.totalorder %s69, %s71
      %p75 = scmp.eq.s32.totalorder %s14, 0
      %p76 = por %p74, %p75
      %p77 = scmp.ne.s32.totalorder %s69, %s71
      %p78 = scmp.eq.s32.totalorder %s19, 1
      %p79 = por %p77, %p78
      %p80 = scmp.ne.s32.totalorder %s71, %s72
      %p81 = scmp.eq.s32.totalorder %s19, 0
      %p82 = por %p80, %p81
      %p83 = scmp.ne.s32.totalorder %s71, %s72
      %p84 = scmp.eq.s32.totalorder %s20, 1
      %p85 = por %p83, %p84
      %p87 = scmp.ne.s32.totalorder %s72, %s86
      %p88 = scmp.eq.s32.totalorder %s20, 0
      %p89 = por %p87, %p88
      %s90 = ssub.s32 %s14, %s21
      %p91 = scmp.eq.s32.totalorder %s90, 0
      %s93 = sadd.s32 %s92, 1
      %s94 = scalar_select %p91, %s92, %s93
      %p97 = pneg %p91
      %p98 = scmp.eq.s32.totalorder %s14, 1
      %p99 = por %p97, %p98
      %p100 = scmp.ne.s32.totalorder %s92, %s95
      %p101 = scmp.eq.s32.totalorder %s14, 0
      %p102 = por %p100, %p101
      %p103 = scmp.ne.s32.totalorder %s92, %s95
      %p104 = scmp.eq.s32.totalorder %s19, 1
      %p105 = por %p103, %p104
      %p106 = scmp.ne.s32.totalorder %s95, %s96
      %p107 = scmp.eq.s32.totalorder %s19, 0
      %p108 = por %p106, %p107
      %p109 = scmp.ne.s32.totalorder %s95, %s96
      %p110 = scmp.eq.s32.totalorder %s20, 1
      %p111 = por %p109, %p110
      %p113 = scmp.ne.s32.totalorder %s96, %s112
      %p114 = scmp.eq.s32.totalorder %s20, 0
      %p115 = por %p113, %p114
      %p116 = scmp.le.s32.totalorder 1, %s14
      %p117 = scmp.lt.s32.totalorder %s14, 3
      %p118 = pnand %p116, %p117
      %p119 = pneg %p118
      // Predicated region
      $region9: #{tpu_custom_call.1} parent=5 // pred_check
        _
      $region10: #{tpu_custom_call.1} parent=5 // pred_check_branch
        %121 = sbr.rel (%p118) target = $region12
      $region11: #{tpu_custom_call.1} parent=5 // pred_region
        %s122 = ssub.s32 %s14, 1
        // Predicated region
        $region13: #{tpu_custom_call.1} parent=11 // pred_check
          %p123 = pneg %p61
        $region14: #{tpu_custom_call.1} parent=11 // pred_check_branch
          %125 = sbr.rel (%p123) target = $region16
        $region15: #{tpu_custom_call.1} parent=11 // pred_region
          %s127 = ssub.s32 64, 64
          %128 = vsyncadd [#allocation4], %s127
          %131 = dma.hbm_to_smem %s1, 64, [#allocation6], [#allocation4]
        $region16: #{tpu_custom_call.1} parent=11 // pred_fallthru
          _
        // Predicated region
        $region17: #{tpu_custom_call.1} parent=11 // pred_check
          %p132 = pneg %p82
        $region18: #{tpu_custom_call.1} parent=11 // pred_check_branch
          %134 = sbr.rel (%p132) target = $region20
        $region19: #{tpu_custom_call.1} parent=11 // pred_region
          %s136 = ssub.s32 16, 16
          %137 = vsyncadd [#allocation5], %s136
          %s139 = sshll.u32 %s2, 4
          %s140 = int_to_ptr.vmem [resolvable:$true] %s139
          %142 = dma.vmem_to_smem %s140, 16, [#allocation7], [#allocation5]
        $region20: #{tpu_custom_call.1} parent=11 // pred_fallthru
          _
      $region12: #{tpu_custom_call.1} parent=5 // pred_fallthru
        _
      %p143 = scmp.lt.s32.totalorder %s14, 2
      // Predicated region
      $region21: #{tpu_custom_call.1} parent=5 // pred_check
        %p144 = pneg %p143
      $region22: #{tpu_custom_call.1} parent=5 // pred_check_branch
        %146 = sbr.rel (%p144) target = $region24
      $region23: #{tpu_custom_call.1} parent=5 // pred_region
        // Predicated region
        $region25: #{tpu_custom_call.1} parent=23 // pred_check
          %p147 = pneg %p34
        $region26: #{tpu_custom_call.1} parent=23 // pred_check_branch
          %149 = sbr.rel (%p147) target = $region28
        $region27: #{tpu_custom_call.1} parent=23 // pred_region
          %s150 = sand.u32 %s24, 1
          %s151 = scalar_lea.sflag [#allocation3], %s150
          %s152 = sand.u32 %s24, 1
          %s153 = smul.addr %s152, 8
          %s154 = scalar_lea.vmem [#allocation2], %s153
          %s156 = ssub.s32 128, 128
          %157 = vsyncadd %s151, %s156
          %s158 = smul.addr %s14, 64
          %s159 = scalar_lea.hbm %s0, %s158
          %s160 = sshll.u32 %s154, 4
          %s161 = int_to_ptr.vmem [resolvable:$true] %s160
          %166 = dma.hbm_to_vmem [thread:$0]  %s159, 128, %s161, %s151, 128, 64, 4
        $region28: #{tpu_custom_call.1} parent=23 // pred_fallthru
          _
      $region24: #{tpu_custom_call.1} parent=5 // pred_fallthru
        _
      %p167 = scmp.le.s32.totalorder 1, %s14
      %p168 = scmp.lt.s32.totalorder %s14, 3
      %p169 = pnand %p167, %p168
      %p170 = pneg %p169
      // Predicated region
      $region29: #{tpu_custom_call.1} parent=5 // pred_check
        _
      $region30: #{tpu_custom_call.1} parent=5 // pred_check_branch
        %172 = sbr.rel (%p169) target = $region32
      $region31: #{tpu_custom_call.1} parent=5 // pred_region
        %s173 = ssub.s32 %s14, 1
        %s174 = sand.u32 %s27, 1
        %s175 = scalar_lea.sflag [#allocation3], %s174
        %s176 = sand.u32 %s27, 1
        %s177 = smul.addr %s176, 8
        %s178 = scalar_lea.vmem [#allocation2], %s177
        // Predicated region
        $region33: #{tpu_custom_call.1} parent=31 // pred_check
          %p179 = pneg %p40
        $region34: #{tpu_custom_call.1} parent=31 // pred_check_branch
          %181 = sbr.rel (%p179) target = $region36
        $region35: #{tpu_custom_call.1} parent=31 // pred_region
          %182 = dma.done %s175, 128
        $region36: #{tpu_custom_call.1} parent=31 // pred_fallthru
          _
        // Predicated region
        $region37: #{tpu_custom_call.1} parent=31 // pred_check
          %p183 = pneg %p61
        $region38: #{tpu_custom_call.1} parent=31 // pred_check_branch
          %185 = sbr.rel (%p183) target = $region40
        $region39: #{tpu_custom_call.1} parent=31 // pred_region
          %186 = dma.done [#allocation4], 64
        $region40: #{tpu_custom_call.1} parent=31 // pred_fallthru
          _
        // Predicated region
        $region41: #{tpu_custom_call.1} parent=31 // pred_check
          %p187 = pneg %p82
        $region42: #{tpu_custom_call.1} parent=31 // pred_check_branch
          %189 = sbr.rel (%p187) target = $region44
        $region43: #{tpu_custom_call.1} parent=31 // pred_region
          %190 = dma.done [#allocation5], 16
        $region44: #{tpu_custom_call.1} parent=31 // pred_fallthru
          _
        %191 = sfence
        %s192 = sand.u32 %s27, 1
        %s193 = scalar_lea.sflag [#allocation3], %s192
        %s194 = sand.u32 %s27, 1
        %s195 = smul.addr %s194, 8
        %s196 = scalar_lea.vmem [#allocation2], %s195
        %p197 = pneg %p40
        %p198 = pneg %p37
        %p199 = pneg %p61
        %p200 = pneg %p58
        %p201 = pneg %p82
        %p202 = pneg %p79
        %p203 = pneg %p108
        %p204 = pneg %p105
        %s205 = sand.u32 %s95, 1
        %s206 = sand.u32 %s95, 1
        %s207 = smul.addr %s206, 8
        %s208 = scalar_lea.vmem [#allocation8], %s207
        %v209 = vld [vmem:[%s178] sm:$0xf]
        %v210 = vld [vmem:[%s178 + $0x4] sm:$0xf]
        %s211 = sld [smem:[#allocation6]]
        %v212 = vstv %s211
        %v213 = vmul.f32 %v209, %v212
        %v214 = vmul.f32 %v210, %v212
        %s215 = sld [smem:[#allocation6 + $0x1]]
        %v216 = vstv %s215
        %v217 = vmul.f32 %v209, %v216
        %v218 = vmul.f32 %v210, %v216
        %v221 = vrot.slane %v217, 1
        %v222 = vrot.slane %v218, 1
        %v225 = vadd.f32 %v213, %v221
        %v226 = vadd.f32 %v214, %v222
        %s227 = sld [smem:[#allocation6 + $0x2]]
        %v228 = vstv %s227
        %v229 = vmul.f32 %v209, %v228
        %v230 = vmul.f32 %v210, %v228
        %v233 = vrot.slane %v229, 2
        %v234 = vrot.slane %v230, 2
        %v237 = vadd.f32 %v225, %v233
        %v238 = vadd.f32 %v226, %v234
        %s239 = sld [smem:[#allocation6 + $0x3]]
        %v240 = vstv %s239
        %v241 = vmul.f32 %v209, %v240
        %v242 = vmul.f32 %v210, %v240
        %v245 = vrot.slane %v241, 3
        %v246 = vrot.slane %v242, 3
        %v249 = vadd.f32 %v237, %v245
        %v250 = vadd.f32 %v238, %v246
        %s251 = sld [smem:[#allocation7]]
        %v252 = vstv %s251
        %v253 = vadd.f32 %v249, %v252
        %v254 = vadd.f32 %v250, %v252
        %s255 = sld [smem:[#allocation6 + $0x80]]
        %v256 = vstv %s255
        %v257 = vmul.f32 %v209, %v256
        %v258 = vmul.f32 %v210, %v256
        %s259 = sld [smem:[#allocation6 + $0x81]]
        %v260 = vstv %s259
        %v261 = vmul.f32 %v209, %v260
        %v262 = vmul.f32 %v210, %v260
        %v265 = vrot.slane %v261, 1
        %v266 = vrot.slane %v262, 1
        %v269 = vadd.f32 %v257, %v265
        %v270 = vadd.f32 %v258, %v266
        %s271 = sld [smem:[#allocation6 + $0x82]]
        %v272 = vstv %s271
        %v273 = vmul.f32 %v209, %v272
        %v274 = vmul.f32 %v210, %v272
        %v277 = vrot.slane %v273, 2
        %v278 = vrot.slane %v274, 2
        %v281 = vadd.f32 %v269, %v277
        %v282 = vadd.f32 %v270, %v278
        %s283 = sld [smem:[#allocation6 + $0x83]]
        %v284 = vstv %s283
        %v285 = vmul.f32 %v209, %v284
        %v286 = vmul.f32 %v210, %v284
        %v289 = vrot.slane %v285, 3
        %v290 = vrot.slane %v286, 3
        %v293 = vadd.f32 %v281, %v289
        %v294 = vadd.f32 %v282, %v290
        %s295 = sld [smem:[#allocation7 + $0x1]]
        %v296 = vstv %s295
        %v297 = vadd.f32 %v293, %v296
        %v298 = vadd.f32 %v294, %v296
        %s299 = sld [smem:[#allocation6 + $0x100]]
        %v300 = vstv %s299
        %v301 = vmul.f32 %v209, %v300
        %v302 = vmul.f32 %v210, %v300
        %s303 = sld [smem:[#allocation6 + $0x101]]
        %v304 = vstv %s303
        %v305 = vmul.f32 %v209, %v304
        %v306 = vmul.f32 %v210, %v304
        %v309 = vrot.slane %v305, 1
        %v310 = vrot.slane %v306, 1
        %v313 = vadd.f32 %v301, %v309
        %v314 = vadd.f32 %v302, %v310
        %s315 = sld [smem:[#allocation6 + $0x102]]
        %v316 = vstv %s315
        %v317 = vmul.f32 %v209, %v316
        %v318 = vmul.f32 %v210, %v316
        %v321 = vrot.slane %v317, 2
        %v322 = vrot.slane %v318, 2
        %v325 = vadd.f32 %v313, %v321
        %v326 = vadd.f32 %v314, %v322
        %s327 = sld [smem:[#allocation6 + $0x103]]
        %v328 = vstv %s327
        %v329 = vmul.f32 %v209, %v328
        %v330 = vmul.f32 %v210, %v328
        %v333 = vrot.slane %v329, 3
        %v334 = vrot.slane %v330, 3
        %v337 = vadd.f32 %v325, %v333
        %v338 = vadd.f32 %v326, %v334
        %s339 = sld [smem:[#allocation7 + $0x2]]
        %v340 = vstv %s339
        %v341 = vadd.f32 %v337, %v340
        %v342 = vadd.f32 %v338, %v340
        %v345 = vrot.slane %v297, 7
        %v346 = vrot.slane %v298, 7
        %v351 = vrot.slane %v341, 6
        %v352 = vrot.slane %v342, 6
        %vm355 = vcmask 1040384
        %v356 = vsel %vm355, %v253, %v345
        %v357 = vsel %vm355, %v254, %v346
        %vm358 = vcmask 1041408
        %v359 = vsel %vm358, %v356, %v351
        %v360 = vsel %vm358, %v357, %v352
        %361 = vst [vmem:[%s208] sm:$0x7] %v359
        %362 = vst [vmem:[%s208 + $0x4] sm:$0x7] %v360
        %s363 = sand.u32 %s95, 1
        %s364 = sand.u32 %s95, 1
        %s365 = smul.addr %s364, 8
        %s366 = scalar_lea.vmem [#allocation8], %s365
        // Predicated region
        $region45: #{tpu_custom_call.1} parent=31 // pred_check
          %p367 = pneg %p105
        $region46: #{tpu_custom_call.1} parent=31 // pred_check_branch
          %369 = sbr.rel (%p367) target = $region48
        $region47: #{tpu_custom_call.1} parent=31 // pred_region
          %s370 = smul.addr %s19, 4
          %s371 = scalar_lea.vmem %s3, %s370
          // Predicated region
          $region49: #{tpu_custom_call.1} parent=47 // pred_check
            _
          $region50: #{tpu_custom_call.1} parent=47 // pred_check_branch
            %373 = sbr.rel (0) target = $region52
          $region51: #{tpu_custom_call.1} parent=47 // pred_region
            // Predicated region
            $region53: #{tpu_custom_call.1} parent=51 // pred_check
              _
            $region54: #{tpu_custom_call.1} parent=51 // pred_check_branch
              %375 = sbr.rel target = $region56
            $region55: #{tpu_custom_call.1} parent=51 // pred_region
              // Predicated region
              $region68: #{tpu_custom_call.1} parent=55 // pred_check
                _
              $region69: #{tpu_custom_call.1} parent=55 // pred_check_branch
                %392 = sbr.rel (0) target = $region71
              $region70: #{tpu_custom_call.1} parent=55 // pred_region
                loop: start=0, step=1, limit=1
                $region72: #{tpu_custom_call.1} parent=70 // loop_pre_header
                  _
                $region73: #{tpu_custom_call.1} parent=70 // loop_header
                  %s394 = sphi 0, %s398
                  %p395 = scmp.ge.s32.totalorder %s394, 1
                  %s399 = sphi %s366, %s366
                  %s400 = sphi %s371, %s371
                $region74: #{tpu_custom_call.1} parent=70 // loop_header_branch
                  %397 = sbr.rel (%p395) target = $region78
                $region75: #{tpu_custom_call.1} parent=70 // loop_body
                  _
                $region76: #{tpu_custom_call.1} parent=70 // loop_footer
                  %s398 = sadd.s32 1, %s394
                $region77: #{tpu_custom_call.1} parent=70 // loop_footer_branch
                  %393 = sbr.rel target = $region73
                $region78: #{tpu_custom_call.1} parent=70 // loop_exit
                  _
                loop: start=0, step=1, limit=1
                $region79: #{tpu_custom_call.1} parent=70 // loop_pre_header
                  _
                $region80: #{tpu_custom_call.1} parent=70 // loop_header
                  %s403 = sphi 0, %s407
                  %p404 = scmp.ge.s32.totalorder %s403, 1
                  %s408 = sphi %s366, %s366
                  %s409 = sphi %s371, %s371
                $region81: #{tpu_custom_call.1} parent=70 // loop_header_branch
                  %406 = sbr.rel (%p404) target = $region85
                $region82: #{tpu_custom_call.1} parent=70 // loop_body
                  %v410 = vld [vmem:[%s408] sm:$0xf]
                  %411 = vst [vmem:[%s409] sm:$0xf] %v410
                  %v412 = vld [vmem:[%s408 + $0x4] sm:$0xf]
                  %413 = vst [vmem:[%s409 + $0x8] sm:$0xf] %v412
                $region83: #{tpu_custom_call.1} parent=70 // loop_footer
                  %s407 = sadd.s32 1, %s403
                $region84: #{tpu_custom_call.1} parent=70 // loop_footer_branch
                  %402 = sbr.rel target = $region80
                $region85: #{tpu_custom_call.1} parent=70 // loop_exit
                  _
              $region71: #{tpu_custom_call.1} parent=55 // pred_fallthru
                _
            $region56: #{tpu_custom_call.1} parent=51 // pred_fallthru
              _
            // Predicated region
            $region57: #{tpu_custom_call.1} parent=51 // pred_check
              _
            $region58: #{tpu_custom_call.1} parent=51 // pred_check_branch
              %377 = sbr.rel (0) target = $region60
            $region59: #{tpu_custom_call.1} parent=51 // pred_region
              loop: start=0, step=1, limit=1
              $region61: #{tpu_custom_call.1} parent=59 // loop_pre_header
                _
              $region62: #{tpu_custom_call.1} parent=59 // loop_header
                %s380 = sphi 0, %s384
                %p381 = scmp.ge.s32.totalorder %s380, 1
                %s385 = sphi %s366, %s366
                %s386 = sphi %s371, %s371
              $region63: #{tpu_custom_call.1} parent=59 // loop_header_branch
                %383 = sbr.rel (%p381) target = $region67
              $region64: #{tpu_custom_call.1} parent=59 // loop_body
                %v387 = vld [vmem:[%s385] sm:$0xf]
                %388 = vst [vmem:[%s386] sm:$0xf] %v387
                %v389 = vld [vmem:[%s385 + $0x4] sm:$0xf]
                %390 = vst [vmem:[%s386 + $0x8] sm:$0xf] %v389
              $region65: #{tpu_custom_call.1} parent=59 // loop_footer
                %s384 = sadd.s32 1, %s380
              $region66: #{tpu_custom_call.1} parent=59 // loop_footer_branch
                %379 = sbr.rel target = $region62
              $region67: #{tpu_custom_call.1} parent=59 // loop_exit
                _
            $region60: #{tpu_custom_call.1} parent=51 // pred_fallthru
              _
          $region52: #{tpu_custom_call.1} parent=47 // pred_fallthru
            _
          %414 = vnop
        $region48: #{tpu_custom_call.1} parent=31 // pred_fallthru
          _
      $region32: #{tpu_custom_call.1} parent=5 // pred_fallthru
        _
      %p415 = scmp.le.s32.totalorder 2, %s14
      // Predicated region
      $region86: #{tpu_custom_call.1} parent=5 // pred_check
        %p416 = pneg %p415
      $region87: #{tpu_custom_call.1} parent=5 // pred_check_branch
        %418 = sbr.rel (%p416) target = $region89
      $region88: #{tpu_custom_call.1} parent=5 // pred_region
        %s419 = ssub.s32 %s14, 2
        // Predicated region
        $region90: #{tpu_custom_call.1} parent=88 // pred_check
          %p420 = pneg %p111
        $region91: #{tpu_custom_call.1} parent=88 // pred_check_branch
          %422 = sbr.rel (%p420) target = $region93
        $region92: #{tpu_custom_call.1} parent=88 // pred_region
          %s423 = sand.u32 %s96, 1
          %s424 = sand.u32 %s96, 1
          %s425 = smul.addr %s424, 8
          %s426 = scalar_lea.vmem [#allocation8], %s425
        $region93: #{tpu_custom_call.1} parent=88 // pred_fallthru
          _
      $region89: #{tpu_custom_call.1} parent=5 // pred_fallthru
        _
    $region6: #{tpu_custom_call.1} parent=1 // loop_footer
      %s18 = sadd.s32 1, %s14
    $region7: #{tpu_custom_call.1} parent=1 // loop_footer_branch
      %13 = sbr.rel target = $region3
    $region8: #{tpu_custom_call.1} parent=1 // loop_exit
      _
    %427 = vsyncpa [#allocation3], 1
    %s428 = scalar_lea.sflag [#allocation3], 1
    %429 = vsyncpa %s428, 1
    %430 = vsyncpa [#allocation4], 1
    %s431 = scalar_lea.sflag [#allocation4], 1
    %432 = vsyncpa %s431, 1
    %433 = vsyncpa [#allocation5], 1
    %s434 = scalar_lea.sflag [#allocation5], 1
    %435 = vsyncpa %s434, 1

</llo_original>
